<compile_context>
chip_gen: v7x
topology: tpu7x:2x2x1
jax: 0.10.0
libtpu: 0.0.40
codegen_flags: <defaults>
</compile_context>

<pallas_src>
import functools
import math

import jax
import jax.numpy as jnp
from jax import lax
from jax.experimental import pallas as pl
from jax.experimental.pallas import tpu as pltpu


def _rmsnorm_kernel(x_ref, scale_ref, *rest, epsilon, inv_d, has_bias, folded):
    # Unpack optional refs: [bias_row] [seg_sum_mat, seg_bcast_mat] out.
    idx = 0
    bias_ref = None
    if has_bias:
        bias_ref = rest[idx]
        idx += 1
    s1_ref = s2_ref = None
    if folded:
        s1_ref = rest[idx]
        s2_ref = rest[idx + 1]
        idx += 2
    o_ref = rest[idx]

    x = x_ref[...].astype(jnp.float32)            # (br, W)
    sq = x * x

    if folded:
        # Each physical row holds `fold` logical rows of width D.  Segmented
        # mean via two skinny MXU matmuls against host-built 0/1 matrices
        # (resident in VMEM).  HIGHEST precision keeps f32 accuracy; cost is
        # ~2*fold MACs/element instead of W MACs for a dense (W,W) matmul.
        seg_sum = jnp.dot(sq, s1_ref[...],
                          preferred_element_type=jnp.float32,
                          precision=lax.Precision.HIGHEST)        # (br, fold)
        # Exact divide, eps added to the std (module semantics).
        inv_seg = 1.0 / (jnp.sqrt(seg_sum * inv_d) + epsilon)      # (br, fold)
        inv = jnp.dot(inv_seg, s2_ref[...],
                      preferred_element_type=jnp.float32,
                      precision=lax.Precision.HIGHEST)             # (br, W)
    else:
        mean_sq = jnp.mean(sq, axis=-1, keepdims=True)             # (br, 1)
        inv = 1.0 / (jnp.sqrt(mean_sq) + epsilon)

    out = x * inv * scale_ref[...]                # scale/bias pre-cast to f32
    if has_bias:
        out = out + bias_ref[...]
    o_ref[...] = out.astype(o_ref.dtype)


def _vmem_capacity_bytes():
    try:
        info = pltpu.get_tpu_info()
        cap = getattr(info, "vmem_capacity_bytes", None)
        if cap:
            return int(cap)
    except Exception:
        pass
    return 64 * 1024 * 1024   # conservative (v7x per-TC VMEM)


def rms_norm(x, scale, bias=None, *, epsilon=1e-8, block_rows=None):
    """RMSNorm over the last axis of x. x: [..., D], scale/bias: [D]."""
    orig_shape = x.shape
    D = orig_shape[-1]
    rows = 1
    for s in orig_shape[:-1]:
        rows *= s

    # --- lane folding: make the lane dim a multiple of 128 for dense stores ---
    fold = 1
    if D % 128 != 0:
        f = 128 // math.gcd(D, 128)      # smallest f with (f*D) % 128 == 0
        if f > 1 and rows % f == 0 and f * D <= 2048:
            fold = f
    folded = fold > 1
    R = rows // fold
    W = D * fold

    x2d = x.reshape(R, W)
    has_bias = bias is not None

    scale_f32 = scale.astype(jnp.float32)
    scale_row = (jnp.tile(scale_f32, fold) if folded else scale_f32).reshape(1, W)

    # --- generation-aware block / VMEM sizing ---
    vmem_cap = _vmem_capacity_bytes()
    vmem_limit = min(vmem_cap // 2, 96 * 1024 * 1024)       # 32 MiB on v7x, 64 MiB on v5e/v6e
    block_target = (4 * 1024 * 1024 if vmem_cap >= 96 * 1024 * 1024
                    else 2 * 1024 * 1024)

    itemsize = jnp.dtype(x.dtype).itemsize
    mult = max(8, 32 // itemsize)        # sublane packing: 8 f32 / 16 bf16 / 32 int8

    if block_rows is None:
        br_hbm = block_target // max(W * itemsize, 1)
        # VMEM envelope: double-buffered in + out blocks in x.dtype plus
        # ~3 f32 temporaries (x, sq, out) for the live block.
        per_row_bytes = W * (4 * itemsize + 3 * 4)
        br_vmem = int(vmem_limit * 0.6) // max(per_row_bytes, 1)
        br = min(br_hbm, br_vmem, 8192)
    else:
        br = int(block_rows)
    br = max(mult, (br // mult) * mult)
    if br >= R:
        br = R                           # single block; allowed even if R % mult != 0
    # Ragged last block: Pallas pads OOB reads and masks OOB writes.  This is
    # safe because the op is strictly per-row; any future cross-row statistic
    # would need an explicit in-kernel mask.
    grid = (pl.cdiv(R, br),)

    args = [x2d, scale_row]
    in_specs = [
        pl.BlockSpec((br, W), lambda i: (i, 0)),
        pl.BlockSpec((1, W), lambda i: (0, 0)),
    ]
    if has_bias:
        bias_f32 = bias.astype(jnp.float32)
        bias_row = (jnp.tile(bias_f32, fold) if folded else bias_f32).reshape(1, W)
        args.append(bias_row)
        in_specs.append(pl.BlockSpec((1, W), lambda i: (0, 0)))
    if folded:
        # 0/1 segment matrices, built once on the host, resident in VMEM.
        lane_grp = jnp.arange(W, dtype=jnp.int32) // D          # (W,)
        grp = jnp.arange(fold, dtype=jnp.int32)                 # (fold,)
        seg_sum_mat = (lane_grp[:, None] == grp[None, :]).astype(jnp.float32)   # (W, fold)
        seg_bcast_mat = seg_sum_mat.T                                            # (fold, W)
        args += [seg_sum_mat, seg_bcast_mat]
        in_specs += [
            pl.BlockSpec((W, fold), lambda i: (0, 0)),
            pl.BlockSpec((fold, W), lambda i: (0, 0)),
        ]

    kernel = functools.partial(
        _rmsnorm_kernel,
        epsilon=float(epsilon),
        inv_d=1.0 / float(D),
        has_bias=has_bias,
        folded=folded,
    )

    out2d = pl.pallas_call(
        kernel,
        out_shape=jax.ShapeDtypeStruct((R, W), x.dtype),
        grid_spec=pltpu.PrefetchScalarGridSpec(
            num_scalar_prefetch=0,
            grid=grid,
            in_specs=in_specs,
            out_specs=pl.BlockSpec((br, W), lambda i: (i, 0)),
        ),
        compiler_params=pltpu.CompilerParams(
            dimension_semantics=("parallel",),
            vmem_limit_bytes=vmem_limit,
        ),
    )(*args)

    return out2d.reshape(orig_shape)


if __name__ == "__main__":
    # Module config: dimension=32, epsilon=1e-8, is_bias=True
    dimension = 32
    epsilon = 1e-8

    key = jax.random.PRNGKey(0)
    k1, k2, k3, k4, k5, k6, k7 = jax.random.split(key, 7)

    def ref_rmsnorm(x, s, b=None, eps=1e-8):
        x_std = jnp.sqrt(jnp.mean(x ** 2, axis=-1, keepdims=True))
        out = s * (x / (x_std + eps))
        return out + b if b is not None else out

    # --- Test 1: module shapes (batch=2, seq=8, hidden=32) -> lane-folded path.
    x = jax.random.normal(k1, (2, 8, dimension), dtype=jnp.float32)
    scale = jnp.ones((dimension,), dtype=jnp.float32)   # nn.Parameter(torch.ones)
    bias = jnp.zeros((dimension,), dtype=jnp.float32)   # nn.Parameter(torch.zeros)
    out = jax.block_until_ready(rms_norm(x, scale, bias, epsilon=epsilon))
    ref = ref_rmsnorm(x, scale, bias, epsilon)
    assert jnp.allclose(out, ref, atol=1e-5, rtol=1e-5), float(
        jnp.max(jnp.abs(out - ref)))

    # --- Test 2: no-bias, wide feature dim (plain row-reduce path).
    D2 = 256
    x2 = jax.random.normal(k2, (3, 5, D2), dtype=jnp.float32)
    s2 = jax.random.normal(k3, (D2,), dtype=jnp.float32)
    out2 = jax.block_until_ready(rms_norm(x2, s2, epsilon=epsilon))
    ref2 = ref_rmsnorm(x2, s2, None, epsilon)
    assert jnp.allclose(out2, ref2, atol=1e-5, rtol=1e-5)

    # --- Test 3: ragged last block (rows not a multiple of block_rows).
    D3 = 128
    x3 = jax.random.normal(k4, (4, 5, D3), dtype=jnp.float32)   # 20 rows
    s3 = jax.random.normal(k5, (D3,), dtype=jnp.float32)
    out3 = jax.block_until_ready(rms_norm(x3, s3, epsilon=epsilon, block_rows=8))
    ref3 = ref_rmsnorm(x3, s3, None, epsilon)
    assert jnp.allclose(out3, ref3, atol=1e-5, rtol=1e-5)

    # --- Test 4: generalized fold (D=48 does not divide 128; fold=8 -> W=384).
    D4 = 48
    x4 = jax.random.normal(k6, (2, 8, D4), dtype=jnp.float32)   # 16 rows
    s4 = jax.random.normal(k7, (D4,), dtype=jnp.float32)
    out4 = jax.block_until_ready(rms_norm(x4, s4, epsilon=epsilon))
    ref4 = ref_rmsnorm(x4, s4, None, epsilon)
    assert jnp.allclose(out4, ref4, atol=1e-5, rtol=1e-5)

    print("KERNEL_OK")
</pallas_src>

<mosaic_0001>
module attributes {stable_mosaic.version = 11 : i64} {
  func.func @_rmsnorm_kernel(%arg0: i32, %arg1: memref<4x128xf32, #tpu.memory_space<vmem>>, %arg2: memref<1x128xf32, #tpu.memory_space<vmem>>, %arg3: memref<1x128xf32, #tpu.memory_space<vmem>>, %arg4: memref<128x4xf32, #tpu.memory_space<vmem>>, %arg5: memref<4x128xf32, #tpu.memory_space<vmem>>, %arg6: memref<4x128xf32, #tpu.memory_space<vmem>>) attributes {dimension_semantics = [#tpu.dimension_semantics<parallel>], iteration_bounds = array<i64: 1>, scalar_prefetch = 0 : i64, scratch_operands = 0 : i64, tpu.core_type = #tpu.core_type<tc>, window_params = [{transform_indices = @transform_0, window_bounds = array<i64: 4, 128>}, {pipeline_mode = #tpu.pipeline_mode<synchronous>, transform_indices = @transform_1, window_bounds = array<i64: 1, 128>}, {pipeline_mode = #tpu.pipeline_mode<synchronous>, transform_indices = @transform_2, window_bounds = array<i64: 1, 128>}, {pipeline_mode = #tpu.pipeline_mode<synchronous>, transform_indices = @transform_3, window_bounds = array<i64: 128, 4>}, {pipeline_mode = #tpu.pipeline_mode<synchronous>, transform_indices = @transform_4, window_bounds = array<i64: 4, 128>}, {transform_indices = @transform_5, window_bounds = array<i64: 4, 128>}]} {
    %c0 = arith.constant 0 : index
    %c0_0 = arith.constant 0 : index
    %0 = vector.load %arg1[%c0, %c0_0] : memref<4x128xf32, #tpu.memory_space<vmem>>, vector<4x128xf32>
    %1 = arith.mulf %0, %0 : vector<4x128xf32>
    %c0_1 = arith.constant 0 : index
    %c0_2 = arith.constant 0 : index
    %2 = vector.load %arg4[%c0_1, %c0_2] : memref<128x4xf32, #tpu.memory_space<vmem>>, vector<128x4xf32>
    %cst = arith.constant dense<0.000000e+00> : vector<4x4xf32>
    %3 = tpu.matmul %1, %2, %cst {dimension_numbers = #tpu.dot_dimension_numbers<[1], [0], [0], [1], [0, 0, 1, 1], [], []>, precision = #tpu.contract_precision<fp32>} : vector<4x128xf32>, vector<128x4xf32>, vector<4x4xf32> -> vector<4x4xf32>
    %cst_3 = arith.constant 3.125000e-02 : f32
    %4 = vector.broadcast %cst_3 : f32 to vector<4x4xf32>
    %5 = arith.mulf %3, %4 : vector<4x4xf32>
    %6 = math.sqrt %5 : vector<4x4xf32>
    %cst_4 = arith.constant 9.99999993E-9 : f32
    %7 = vector.broadcast %cst_4 : f32 to vector<4x4xf32>
    %8 = arith.addf %6, %7 : vector<4x4xf32>
    %cst_5 = arith.constant 1.000000e+00 : f32
    %9 = vector.broadcast %cst_5 : f32 to vector<4x4xf32>
    %10 = arith.divf %9, %8 : vector<4x4xf32>
    %c0_6 = arith.constant 0 : index
    %c0_7 = arith.constant 0 : index
    %11 = vector.load %arg5[%c0_6, %c0_7] : memref<4x128xf32, #tpu.memory_space<vmem>>, vector<4x128xf32>
    %cst_8 = arith.constant dense<0.000000e+00> : vector<4x128xf32>
    %12 = tpu.matmul %10, %11, %cst_8 {dimension_numbers = #tpu.dot_dimension_numbers<[1], [0], [0], [1], [0, 0, 1, 1], [], []>, precision = #tpu.contract_precision<fp32>} : vector<4x4xf32>, vector<4x128xf32>, vector<4x128xf32> -> vector<4x128xf32>
    %13 = arith.mulf %0, %12 : vector<4x128xf32>
    %c0_9 = arith.constant 0 : index
    %c0_10 = arith.constant 0 : index
    %14 = vector.load %arg2[%c0_9, %c0_10] : memref<1x128xf32, #tpu.memory_space<vmem>>, vector<1x128xf32>
    %15 = vector.broadcast %14 : vector<1x128xf32> to vector<4x128xf32>
    %16 = arith.mulf %13, %15 : vector<4x128xf32>
    %c0_11 = arith.constant 0 : index
    %c0_12 = arith.constant 0 : index
    %17 = vector.load %arg3[%c0_11, %c0_12] : memref<1x128xf32, #tpu.memory_space<vmem>>, vector<1x128xf32>
    %18 = vector.broadcast %17 : vector<1x128xf32> to vector<4x128xf32>
    %19 = arith.addf %16, %18 : vector<4x128xf32>
    %c0_13 = arith.constant 0 : index
    %c0_14 = arith.constant 0 : index
    %20 = vector.load %arg6[%c0_13, %c0_14] : memref<4x128xf32, #tpu.memory_space<vmem>>, vector<4x128xf32>
    tpu.vector_store %arg6[%c0_13, %c0_14], %19 {strides = array<i32>} : memref<4x128xf32, #tpu.memory_space<vmem>>, vector<4x128xf32>,
    return
  }
  func.func @transform_0(%arg0: i32) -> (i32, i32) {
    %c0_i32 = arith.constant 0 : i32
    %c0_i32_0 = arith.constant 0 : i32
    return %arg0, %c0_i32 : i32, i32
  }
  func.func @transform_1(%arg0: i32) -> (i32, i32) {
    %c0_i32 = arith.constant 0 : i32
    %c0_i32_0 = arith.constant 0 : i32
    %c0_i32_1 = arith.constant 0 : i32
    return %c0_i32, %c0_i32_0 : i32, i32
  }
  func.func @transform_2(%arg0: i32) -> (i32, i32) {
    %c0_i32 = arith.constant 0 : i32
    %c0_i32_0 = arith.constant 0 : i32
    %c0_i32_1 = arith.constant 0 : i32
    return %c0_i32, %c0_i32_0 : i32, i32
  }
  func.func @transform_3(%arg0: i32) -> (i32, i32) {
    %c0_i32 = arith.constant 0 : i32
    %c0_i32_0 = arith.constant 0 : i32
    %c0_i32_1 = arith.constant 0 : i32
    return %c0_i32, %c0_i32_0 : i32, i32
  }
  func.func @transform_4(%arg0: i32) -> (i32, i32) {
    %c0_i32 = arith.constant 0 : i32
    %c0_i32_0 = arith.constant 0 : i32
    %c0_i32_1 = arith.constant 0 : i32
    return %c0_i32, %c0_i32_0 : i32, i32
  }
  func.func @transform_5(%arg0: i32) -> (i32, i32) {
    %c0_i32 = arith.constant 0 : i32
    %c0_i32_0 = arith.constant 0 : i32
    return %arg0, %c0_i32 : i32, i32
  }
}

</mosaic_0001>

<llo_original>
// kernel: tpu_custom_call.1
$region0: #{tpu_custom_call.1}
  #allocation0 [shape = 'u32[]', space=smem, size = 0x4, offset = 0x4, fixed_abs, tag = 'smem constant byte address 0x4 - core index']
  #allocation1 [shape = 'u32[144,128]{1,0:T(1,128)}', space=vmem, size = 0x12000, scoped, tag = 'internal scratch']
  %s0 = inlined_call_operand.vmem [shape: f32[4,128], index: 0, kind: input, shape index: {}]
  %s1 = inlined_call_operand.vmem [shape: f32[1,128], index: 1, kind: input, shape index: {}]
  %s2 = inlined_call_operand.vmem [shape: f32[1,128], index: 2, kind: input, shape index: {}]
  %s3 = inlined_call_operand.vmem [shape: f32[128,4], index: 3, kind: input, shape index: {}]
  %s4 = inlined_call_operand.vmem [shape: f32[4,128], index: 4, kind: input, shape index: {}]
  %s5 = inlined_call_operand.hbm [shape: f32[4,128], index: 5, kind: output, shape index: {}]
  %s6 = sld [smem:[#allocation0]]
  $region30: #{tpu_custom_call.1} parent=0
    _
  %s8 = ssub.s32 1, %s6
  %s9 = scalar_select 0, %s8, %s6
  $region1: #{tpu_custom_call.1} parent=0
    #allocation2 [shape = 'u8[2048]{0}', space=vmem, size = 0x800, scoped, tag = 'output window, operand 0, single buffered']
    #allocation3 [shape = 's32[1]{0}', space=sflag, size = 0x4, scoped, tag = 'scoped memory for tpu_custom_call.1']
    %10 = vsyncpa [#allocation3], 0
    // Predicated region
    $region2: #{tpu_custom_call.1} parent=1 // pred_check
      _
    $region3: #{tpu_custom_call.1} parent=1 // pred_check_branch
      %12 = sbr.rel (0) target = $region5
    $region4: #{tpu_custom_call.1} parent=1 // pred_region
      _
    $region5: #{tpu_custom_call.1} parent=1 // pred_fallthru
      _
    // Predicated region
    $region6: #{tpu_custom_call.1} parent=1 // pred_check
      _
    $region7: #{tpu_custom_call.1} parent=1 // pred_check_branch
      %14 = sbr.rel (0) target = $region9
    $region8: #{tpu_custom_call.1} parent=1 // pred_region
      _
    $region9: #{tpu_custom_call.1} parent=1 // pred_fallthru
      _
    // Predicated region
    $region10: #{tpu_custom_call.1} parent=1 // pred_check
      _
    $region11: #{tpu_custom_call.1} parent=1 // pred_check_branch
      %16 = sbr.rel (0) target = $region13
    $region12: #{tpu_custom_call.1} parent=1 // pred_region
      _
    $region13: #{tpu_custom_call.1} parent=1 // pred_fallthru
      _
    // Predicated region
    $region14: #{tpu_custom_call.1} parent=1 // pred_check
      _
    $region15: #{tpu_custom_call.1} parent=1 // pred_check_branch
      %18 = sbr.rel (0) target = $region17
    $region16: #{tpu_custom_call.1} parent=1 // pred_region
      _
    $region17: #{tpu_custom_call.1} parent=1 // pred_fallthru
      _
    // Predicated region
    $region18: #{tpu_custom_call.1} parent=1 // pred_check
      _
    $region19: #{tpu_custom_call.1} parent=1 // pred_check_branch
      %20 = sbr.rel (0) target = $region21
    $region20: #{tpu_custom_call.1} parent=1 // pred_region
      _
    $region21: #{tpu_custom_call.1} parent=1 // pred_fallthru
      _
    %v21 = vld [vmem:[%s0] sm:$0xf]
    %v22 = vmul.f32 %v21, %v21
    %v23 = vld [vmem:[%s3] sm:$0xff]
    %v24 = vld [vmem:[%s3 + $0x8] sm:$0xff]
    %v25 = vld [vmem:[%s3 + $0x10] sm:$0xff]
    %v26 = vld [vmem:[%s3 + $0x18] sm:$0xff]
    %v27 = vld [vmem:[%s3 + $0x20] sm:$0xff]
    %v28 = vld [vmem:[%s3 + $0x28] sm:$0xff]
    %v29 = vld [vmem:[%s3 + $0x30] sm:$0xff]
    %v30 = vld [vmem:[%s3 + $0x38] sm:$0xff]
    %v31 = vld [vmem:[%s3 + $0x40] sm:$0xff]
    %v32 = vld [vmem:[%s3 + $0x48] sm:$0xff]
    %v33 = vld [vmem:[%s3 + $0x50] sm:$0xff]
    %v34 = vld [vmem:[%s3 + $0x58] sm:$0xff]
    %v35 = vld [vmem:[%s3 + $0x60] sm:$0xff]
    %v36 = vld [vmem:[%s3 + $0x68] sm:$0xff]
    %v37 = vld [vmem:[%s3 + $0x70] sm:$0xff]
    %v38 = vld [vmem:[%s3 + $0x78] sm:$0xff]
    %39 = vmatprep.subr.mxu0 0.0
    %v40 = vand.u32 %v23, 4294901760
    %41 = vmatpush1.msra.mxu0 %v40
    %42 = vmatprep.subr.mxu0 0.0
    %v43 = vand.u32 %v24, 4294901760
    %44 = vmatpush1.msra.mxu0 %v43
    %45 = vmatprep.subr.mxu0 0.0
    %v46 = vand.u32 %v25, 4294901760
    %47 = vmatpush1.msra.mxu0 %v46
    %48 = vmatprep.subr.mxu0 0.0
    %v49 = vand.u32 %v26, 4294901760
    %50 = vmatpush1.msra.mxu0 %v49
    %51 = vmatprep.subr.mxu0 0.0
    %v52 = vand.u32 %v27, 4294901760
    %53 = vmatpush1.msra.mxu0 %v52
    %54 = vmatprep.subr.mxu0 0.0
    %v55 = vand.u32 %v28, 4294901760
    %56 = vmatpush1.msra.mxu0 %v55
    %57 = vmatprep.subr.mxu0 0.0
    %v58 = vand.u32 %v29, 4294901760
    %59 = vmatpush1.msra.mxu0 %v58
    %60 = vmatprep.subr.mxu0 0.0
    %v61 = vand.u32 %v30, 4294901760
    %62 = vmatpush1.msra.mxu0 %v61
    %63 = vmatprep.subr.mxu0 0.0
    %v64 = vand.u32 %v31, 4294901760
    %65 = vmatpush1.msra.mxu0 %v64
    %66 = vmatprep.subr.mxu0 0.0
    %v67 = vand.u32 %v32, 4294901760
    %68 = vmatpush1.msra.mxu0 %v67
    %69 = vmatprep.subr.mxu0 0.0
    %v70 = vand.u32 %v33, 4294901760
    %71 = vmatpush1.msra.mxu0 %v70
    %72 = vmatprep.subr.mxu0 0.0
    %v73 = vand.u32 %v34, 4294901760
    %74 = vmatpush1.msra.mxu0 %v73
    %75 = vmatprep.subr.mxu0 0.0
    %v76 = vand.u32 %v35, 4294901760
    %77 = vmatpush1.msra.mxu0 %v76
    %78 = vmatprep.subr.mxu0 0.0
    %v79 = vand.u32 %v36, 4294901760
    %80 = vmatpush1.msra.mxu0 %v79
    %81 = vmatprep.subr.mxu0 0.0
    %v82 = vand.u32 %v37, 4294901760
    %83 = vmatpush1.msra.mxu0 %v82
    %84 = vmatprep.subr.mxu0 0.0
    %v85 = vand.u32 %v38, 4294901760
    %86 = vmatpush1.msra.mxu0 %v85
    %87 = vmatprep.subr.mxu0 0.0
    %88 = vmatpush1.msra.mxu0 0.0
    %89 = vmatprep.subr.mxu0 0.0
    %90 = vmatpush1.msra.mxu0 0.0
    %91 = vmatprep.subr.mxu0 0.0
    %92 = vmatpush1.msra.mxu0 0.0
    %93 = vmatprep.subr.mxu0 0.0
    %94 = vmatpush1.msra.mxu0 0.0
    %95 = vmatprep.subr.mxu0 0.0
    %96 = vmatpush1.msra.mxu0 0.0
    %97 = vmatprep.subr.mxu0 0.0
    %98 = vmatpush1.msra.mxu0 0.0
    %99 = vmatprep.subr.mxu0 0.0
    %100 = vmatpush1.msra.mxu0 0.0
    %101 = vmatprep.subr.mxu0 0.0
    %102 = vmatpush1.msra.mxu0 0.0
    %103 = vmatprep.subr.mxu0 0.0
    %104 = vmatpush1.msra.mxu0 0.0
    %105 = vmatprep.subr.mxu0 0.0
    %106 = vmatpush1.msra.mxu0 0.0
    %107 = vmatprep.subr.mxu0 0.0
    %108 = vmatpush1.msra.mxu0 0.0
    %109 = vmatprep.subr.mxu0 0.0
    %110 = vmatpush1.msra.mxu0 0.0
    %111 = vmatprep.subr.mxu0 0.0
    %112 = vmatpush1.msra.mxu0 0.0
    %113 = vmatprep.subr.mxu0 0.0
    %114 = vmatpush1.msra.mxu0 0.0
    %115 = vmatprep.subr.mxu0 0.0
    %116 = vmatpush1.msra.mxu0 0.0
    %117 = vmatprep.subr.mxu0 0.0
    %118 = vmatpush1.msra.mxu0 0.0
    %119 = vmatprep.mubr.f32.mxu0 0.0
    %v120 = vand.u32 %v22, 4294901760
    %v121 = vsub.f32 %v22, %v120
    %v122 = vand.u32 %v121, 4294901760
    %v123 = vsub.f32 %v121, %v122
    %v124 = vand.u32 %v123, 4294901760
    %125 = vmatmul.mubr.f32.gmra.mrb[0].mxu0 %v124
    %v126 = vpop.f32.mrb[0].mxu0
    %v127 = vadd.f32 0.0, %v126
    %v128 = vpop.f32.mrb[0].mxu0
    %129 = vdwg.mxu0
    %130 = vmatprep.subr.mxu0 0.0
    %v131 = vand.u32 %v23, 4294901760
    %v132 = vsub.f32 %v23, %v131
    %v133 = vand.u32 %v132, 4294901760
    %v134 = vsub.f32 %v132, %v133
    %v135 = vand.u32 %v134, 4294901760
    %136 = vmatpush1.msra.mxu0 %v135
    %137 = vmatprep.subr.mxu0 0.0
    %v138 = vand.u32 %v24, 4294901760
    %v139 = vsub.f32 %v24, %v138
    %v140 = vand.u32 %v139, 4294901760
    %v141 = vsub.f32 %v139, %v140
    %v142 = vand.u32 %v141, 4294901760
    %143 = vmatpush1.msra.mxu0 %v142
    %144 = vmatprep.subr.mxu0 0.0
    %v145 = vand.u32 %v25, 4294901760
    %v146 = vsub.f32 %v25, %v145
    %v147 = vand.u32 %v146, 4294901760
    %v148 = vsub.f32 %v146, %v147
    %v149 = vand.u32 %v148, 4294901760
    %150 = vmatpush1.msra.mxu0 %v149
    %151 = vmatprep.subr.mxu0 0.0
    %v152 = vand.u32 %v26, 4294901760
    %v153 = vsub.f32 %v26, %v152
    %v154 = vand.u32 %v153, 4294901760
    %v155 = vsub.f32 %v153, %v154
    %v156 = vand.u32 %v155, 4294901760
    %157 = vmatpush1.msra.mxu0 %v156
    %158 = vmatprep.subr.mxu0 0.0
    %v159 = vand.u32 %v27, 4294901760
    %v160 = vsub.f32 %v27, %v159
    %v161 = vand.u32 %v160, 4294901760
    %v162 = vsub.f32 %v160, %v161
    %v163 = vand.u32 %v162, 4294901760
    %164 = vmatpush1.msra.mxu0 %v163
    %165 = vmatprep.subr.mxu0 0.0
    %v166 = vand.u32 %v28, 4294901760
    %v167 = vsub.f32 %v28, %v166
    %v168 = vand.u32 %v167, 4294901760
    %v169 = vsub.f32 %v167, %v168
    %v170 = vand.u32 %v169, 4294901760
    %171 = vmatpush1.msra.mxu0 %v170
    %172 = vmatprep.subr.mxu0 0.0
    %v173 = vand.u32 %v29, 4294901760
    %v174 = vsub.f32 %v29, %v173
    %v175 = vand.u32 %v174, 4294901760
    %v176 = vsub.f32 %v174, %v175
    %v177 = vand.u32 %v176, 4294901760
    %178 = vmatpush1.msra.mxu0 %v177
    %179 = vmatprep.subr.mxu0 0.0
    %v180 = vand.u32 %v30, 4294901760
    %v181 = vsub.f32 %v30, %v180
    %v182 = vand.u32 %v181, 4294901760
    %v183 = vsub.f32 %v181, %v182
    %v184 = vand.u32 %v183, 4294901760
    %185 = vmatpush1.msra.mxu0 %v184
    %186 = vmatprep.subr.mxu0 0.0
    %v187 = vand.u32 %v31, 4294901760
    %v188 = vsub.f32 %v31, %v187
    %v189 = vand.u32 %v188, 4294901760
    %v190 = vsub.f32 %v188, %v189
    %v191 = vand.u32 %v190, 4294901760
    %192 = vmatpush1.msra.mxu0 %v191
    %193 = vmatprep.subr.mxu0 0.0
    %v194 = vand.u32 %v32, 4294901760
    %v195 = vsub.f32 %v32, %v194
    %v196 = vand.u32 %v195, 4294901760
    %v197 = vsub.f32 %v195, %v196
    %v198 = vand.u32 %v197, 4294901760
    %199 = vmatpush1.msra.mxu0 %v198
    %200 = vmatprep.subr.mxu0 0.0
    %v201 = vand.u32 %v33, 4294901760
    %v202 = vsub.f32 %v33, %v201
    %v203 = vand.u32 %v202, 4294901760
    %v204 = vsub.f32 %v202, %v203
    %v205 = vand.u32 %v204, 4294901760
    %206 = vmatpush1.msra.mxu0 %v205
    %207 = vmatprep.subr.mxu0 0.0
    %v208 = vand.u32 %v34, 4294901760
    %v209 = vsub.f32 %v34, %v208
    %v210 = vand.u32 %v209, 4294901760
    %v211 = vsub.f32 %v209, %v210
    %v212 = vand.u32 %v211, 4294901760
    %213 = vmatpush1.msra.mxu0 %v212
    %214 = vmatprep.subr.mxu0 0.0
    %v215 = vand.u32 %v35, 4294901760
    %v216 = vsub.f32 %v35, %v215
    %v217 = vand.u32 %v216, 4294901760
    %v218 = vsub.f32 %v216, %v217
    %v219 = vand.u32 %v218, 4294901760
    %220 = vmatpush1.msra.mxu0 %v219
    %221 = vmatprep.subr.mxu0 0.0
    %v222 = vand.u32 %v36, 4294901760
    %v223 = vsub.f32 %v36, %v222
    %v224 = vand.u32 %v223, 4294901760
    %v225 = vsub.f32 %v223, %v224
    %v226 = vand.u32 %v225, 4294901760
    %227 = vmatpush1.msra.mxu0 %v226
    %228 = vmatprep.subr.mxu0 0.0
    %v229 = vand.u32 %v37, 4294901760
    %v230 = vsub.f32 %v37, %v229
    %v231 = vand.u32 %v230, 4294901760
    %v232 = vsub.f32 %v230, %v231
    %v233 = vand.u32 %v232, 4294901760
    %234 = vmatpush1.msra.mxu0 %v233
    %235 = vmatprep.subr.mxu0 0.0
    %v236 = vand.u32 %v38, 4294901760
    %v237 = vsub.f32 %v38, %v236
    %v238 = vand.u32 %v237, 4294901760
    %v239 = vsub.f32 %v237, %v238
    %v240 = vand.u32 %v239, 4294901760
    %241 = vmatpush1.msra.mxu0 %v240
    %242 = vmatprep.subr.mxu0 0.0
    %243 = vmatpush1.msra.mxu0 0.0
    %244 = vmatprep.subr.mxu0 0.0
    %245 = vmatpush1.msra.mxu0 0.0
    %246 = vmatprep.subr.mxu0 0.0
    %247 = vmatpush1.msra.mxu0 0.0
    %248 = vmatprep.subr.mxu0 0.0
    %249 = vmatpush1.msra.mxu0 0.0
    %250 = vmatprep.subr.mxu0 0.0
    %251 = vmatpush1.msra.mxu0 0.0
    %252 = vmatprep.subr.mxu0 0.0
    %253 = vmatpush1.msra.mxu0 0.0
    %254 = vmatprep.subr.mxu0 0.0
    %255 = vmatpush1.msra.mxu0 0.0
    %256 = vmatprep.subr.mxu0 0.0
    %257 = vmatpush1.msra.mxu0 0.0
    %258 = vmatprep.subr.mxu0 0.0
    %259 = vmatpush1.msra.mxu0 0.0
    %260 = vmatprep.subr.mxu0 0.0
    %261 = vmatpush1.msra.mxu0 0.0
    %262 = vmatprep.subr.mxu0 0.0
    %263 = vmatpush1.msra.mxu0 0.0
    %264 = vmatprep.subr.mxu0 0.0
    %265 = vmatpush1.msra.mxu0 0.0
    %266 = vmatprep.subr.mxu0 0.0
    %267 = vmatpush1.msra.mxu0 0.0
    %268 = vmatprep.subr.mxu0 0.0
    %269 = vmatpush1.msra.mxu0 0.0
    %270 = vmatprep.subr.mxu0 0.0
    %271 = vmatpush1.msra.mxu0 0.0
    %272 = vmatprep.subr.mxu0 0.0
    %273 = vmatpush1.msra.mxu0 0.0
    %274 = vmatprep.mubr.f32.mxu0 0.0
    %v275 = vand.u32 %v22, 4294901760
    %276 = vmatmul.mubr.f32.gmra.mrb[0].mxu0 %v275
    %v277 = vpop.f32.mrb[0].mxu0
    %v278 = vadd.f32 %v127, %v277
    %v279 = vpop.f32.mrb[0].mxu0
    %280 = vdwg.mxu0
    %281 = vmatprep.subr.mxu0 0.0
    %v282 = vand.u32 %v23, 4294901760
    %v283 = vsub.f32 %v23, %v282
    %284 = vmatpush1.msra.mxu0 %v283
    %285 = vmatprep.subr.mxu0 0.0
    %v286 = vand.u32 %v24, 4294901760
    %v287 = vsub.f32 %v24, %v286
    %288 = vmatpush1.msra.mxu0 %v287
    %289 = vmatprep.subr.mxu0 0.0
    %v290 = vand.u32 %v25, 4294901760
    %v291 = vsub.f32 %v25, %v290
    %292 = vmatpush1.msra.mxu0 %v291
    %293 = vmatprep.subr.mxu0 0.0
    %v294 = vand.u32 %v26, 4294901760
    %v295 = vsub.f32 %v26, %v294
    %296 = vmatpush1.msra.mxu0 %v295
    %297 = vmatprep.subr.mxu0 0.0
    %v298 = vand.u32 %v27, 4294901760
    %v299 = vsub.f32 %v27, %v298
    %300 = vmatpush1.msra.mxu0 %v299
    %301 = vmatprep.subr.mxu0 0.0
    %v302 = vand.u32 %v28, 4294901760
    %v303 = vsub.f32 %v28, %v302
    %304 = vmatpush1.msra.mxu0 %v303
    %305 = vmatprep.subr.mxu0 0.0
    %v306 = vand.u32 %v29, 4294901760
    %v307 = vsub.f32 %v29, %v306
    %308 = vmatpush1.msra.mxu0 %v307
    %309 = vmatprep.subr.mxu0 0.0
    %v310 = vand.u32 %v30, 4294901760
    %v311 = vsub.f32 %v30, %v310
    %312 = vmatpush1.msra.mxu0 %v311
    %313 = vmatprep.subr.mxu0 0.0
    %v314 = vand.u32 %v31, 4294901760
    %v315 = vsub.f32 %v31, %v314
    %316 = vmatpush1.msra.mxu0 %v315
    %317 = vmatprep.subr.mxu0 0.0
    %v318 = vand.u32 %v32, 4294901760
    %v319 = vsub.f32 %v32, %v318
    %320 = vmatpush1.msra.mxu0 %v319
    %321 = vmatprep.subr.mxu0 0.0
    %v322 = vand.u32 %v33, 4294901760
    %v323 = vsub.f32 %v33, %v322
    %324 = vmatpush1.msra.mxu0 %v323
    %325 = vmatprep.subr.mxu0 0.0
    %v326 = vand.u32 %v34, 4294901760
    %v327 = vsub.f32 %v34, %v326
    %328 = vmatpush1.msra.mxu0 %v327
    %329 = vmatprep.subr.mxu0 0.0
    %v330 = vand.u32 %v35, 4294901760
    %v331 = vsub.f32 %v35, %v330
    %332 = vmatpush1.msra.mxu0 %v331
    %333 = vmatprep.subr.mxu0 0.0
    %v334 = vand.u32 %v36, 4294901760
    %v335 = vsub.f32 %v36, %v334
    %336 = vmatpush1.msra.mxu0 %v335
    %337 = vmatprep.subr.mxu0 0.0
    %v338 = vand.u32 %v37, 4294901760
    %v339 = vsub.f32 %v37, %v338
    %340 = vmatpush1.msra.mxu0 %v339
    %341 = vmatprep.subr.mxu0 0.0
    %v342 = vand.u32 %v38, 4294901760
    %v343 = vsub.f32 %v38, %v342
    %344 = vmatpush1.msra.mxu0 %v343
    %345 = vmatprep.subr.mxu0 0.0
    %346 = vmatpush1.msra.mxu0 0.0
    %347 = vmatprep.subr.mxu0 0.0
    %348 = vmatpush1.msra.mxu0 0.0
    %349 = vmatprep.subr.mxu0 0.0
    %350 = vmatpush1.msra.mxu0 0.0
    %351 = vmatprep.subr.mxu0 0.0
    %352 = vmatpush1.msra.mxu0 0.0
    %353 = vmatprep.subr.mxu0 0.0
    %354 = vmatpush1.msra.mxu0 0.0
    %355 = vmatprep.subr.mxu0 0.0
    %356 = vmatpush1.msra.mxu0 0.0
    %357 = vmatprep.subr.mxu0 0.0
    %358 = vmatpush1.msra.mxu0 0.0
    %359 = vmatprep.subr.mxu0 0.0
    %360 = vmatpush1.msra.mxu0 0.0
    %361 = vmatprep.subr.mxu0 0.0
    %362 = vmatpush1.msra.mxu0 0.0
    %363 = vmatprep.subr.mxu0 0.0
    %364 = vmatpush1.msra.mxu0 0.0
    %365 = vmatprep.subr.mxu0 0.0
    %366 = vmatpush1.msra.mxu0 0.0
    %367 = vmatprep.subr.mxu0 0.0
    %368 = vmatpush1.msra.mxu0 0.0
    %369 = vmatprep.subr.mxu0 0.0
    %370 = vmatpush1.msra.mxu0 0.0
    %371 = vmatprep.subr.mxu0 0.0
    %372 = vmatpush1.msra.mxu0 0.0
    %373 = vmatprep.subr.mxu0 0.0
    %374 = vmatpush1.msra.mxu0 0.0
    %375 = vmatprep.subr.mxu0 0.0
    %376 = vmatpush1.msra.mxu0 0.0
    %377 = vmatprep.mubr.f32.mxu0 0.0
    %v378 = vand.u32 %v22, 4294901760
    %v379 = vsub.f32 %v22, %v378
    %380 = vmatmul.mubr.f32.gmra.mrb[0].mxu0 %v379
    %v381 = vpop.f32.mrb[0].mxu0
    %v382 = vadd.f32 %v278, %v381
    %v383 = vpop.f32.mrb[0].mxu0
    %384 = vdwg.mxu0
    %385 = vmatprep.subr.mxu0 0.0
    %v386 = vand.u32 %v23, 4294901760
    %387 = vmatpush1.msra.mxu0 %v386
    %388 = vmatprep.subr.mxu0 0.0
    %v389 = vand.u32 %v24, 4294901760
    %390 = vmatpush1.msra.mxu0 %v389
    %391 = vmatprep.subr.mxu0 0.0
    %v392 = vand.u32 %v25, 4294901760
    %393 = vmatpush1.msra.mxu0 %v392
    %394 = vmatprep.subr.mxu0 0.0
    %v395 = vand.u32 %v26, 4294901760
    %396 = vmatpush1.msra.mxu0 %v395
    %397 = vmatprep.subr.mxu0 0.0
    %v398 = vand.u32 %v27, 4294901760
    %399 = vmatpush1.msra.mxu0 %v398
    %400 = vmatprep.subr.mxu0 0.0
    %v401 = vand.u32 %v28, 4294901760
    %402 = vmatpush1.msra.mxu0 %v401
    %403 = vmatprep.subr.mxu0 0.0
    %v404 = vand.u32 %v29, 4294901760
    %405 = vmatpush1.msra.mxu0 %v404
    %406 = vmatprep.subr.mxu0 0.0
    %v407 = vand.u32 %v30, 4294901760
    %408 = vmatpush1.msra.mxu0 %v407
    %409 = vmatprep.subr.mxu0 0.0
    %v410 = vand.u32 %v31, 4294901760
    %411 = vmatpush1.msra.mxu0 %v410
    %412 = vmatprep.subr.mxu0 0.0
    %v413 = vand.u32 %v32, 4294901760
    %414 = vmatpush1.msra.mxu0 %v413
    %415 = vmatprep.subr.mxu0 0.0
    %v416 = vand.u32 %v33, 4294901760
    %417 = vmatpush1.msra.mxu0 %v416
    %418 = vmatprep.subr.mxu0 0.0
    %v419 = vand.u32 %v34, 4294901760
    %420 = vmatpush1.msra.mxu0 %v419
    %421 = vmatprep.subr.mxu0 0.0
    %v422 = vand.u32 %v35, 4294901760
    %423 = vmatpush1.msra.mxu0 %v422
    %424 = vmatprep.subr.mxu0 0.0
    %v425 = vand.u32 %v36, 4294901760
    %426 = vmatpush1.msra.mxu0 %v425
    %427 = vmatprep.subr.mxu0 0.0
    %v428 = vand.u32 %v37, 4294901760
    %429 = vmatpush1.msra.mxu0 %v428
    %430 = vmatprep.subr.mxu0 0.0
    %v431 = vand.u32 %v38, 4294901760
    %432 = vmatpush1.msra.mxu0 %v431
    %433 = vmatprep.subr.mxu0 0.0
    %434 = vmatpush1.msra.mxu0 0.0
    %435 = vmatprep.subr.mxu0 0.0
    %436 = vmatpush1.msra.mxu0 0.0
    %437 = vmatprep.subr.mxu0 0.0
    %438 = vmatpush1.msra.mxu0 0.0
    %439 = vmatprep.subr.mxu0 0.0
    %440 = vmatpush1.msra.mxu0 0.0
    %441 = vmatprep.subr.mxu0 0.0
    %442 = vmatpush1.msra.mxu0 0.0
    %443 = vmatprep.subr.mxu0 0.0
    %444 = vmatpush1.msra.mxu0 0.0
    %445 = vmatprep.subr.mxu0 0.0
    %446 = vmatpush1.msra.mxu0 0.0
    %447 = vmatprep.subr.mxu0 0.0
    %448 = vmatpush1.msra.mxu0 0.0
    %449 = vmatprep.subr.mxu0 0.0
    %450 = vmatpush1.msra.mxu0 0.0
    %451 = vmatprep.subr.mxu0 0.0
    %452 = vmatpush1.msra.mxu0 0.0
    %453 = vmatprep.subr.mxu0 0.0
    %454 = vmatpush1.msra.mxu0 0.0
    %455 = vmatprep.subr.mxu0 0.0
    %456 = vmatpush1.msra.mxu0 0.0
    %457 = vmatprep.subr.mxu0 0.0
    %458 = vmatpush1.msra.mxu0 0.0
    %459 = vmatprep.subr.mxu0 0.0
    %460 = vmatpush1.msra.mxu0 0.0
    %461 = vmatprep.subr.mxu0 0.0
    %462 = vmatpush1.msra.mxu0 0.0
    %463 = vmatprep.subr.mxu0 0.0
    %464 = vmatpush1.msra.mxu0 0.0
    %465 = vmatprep.mubr.f32.mxu0 0.0
    %v466 = vand.u32 %v22, 4294901760
    %v467 = vsub.f32 %v22, %v466
    %v468 = vand.u32 %v467, 4294901760
    %469 = vmatmul.mubr.f32.gmra.mrb[0].mxu0 %v468
    %v470 = vpop.f32.mrb[0].mxu0
    %v471 = vadd.f32 %v382, %v470
    %v472 = vpop.f32.mrb[0].mxu0
    %473 = vdwg.mxu0
    %474 = vmatprep.subr.mxu0 0.0
    %v475 = vand.u32 %v23, 4294901760
    %v476 = vsub.f32 %v23, %v475
    %v477 = vand.u32 %v476, 4294901760
    %478 = vmatpush1.msra.mxu0 %v477
    %479 = vmatprep.subr.mxu0 0.0
    %v480 = vand.u32 %v24, 4294901760
    %v481 = vsub.f32 %v24, %v480
    %v482 = vand.u32 %v481, 4294901760
    %483 = vmatpush1.msra.mxu0 %v482
    %484 = vmatprep.subr.mxu0 0.0
    %v485 = vand.u32 %v25, 4294901760
    %v486 = vsub.f32 %v25, %v485
    %v487 = vand.u32 %v486, 4294901760
    %488 = vmatpush1.msra.mxu0 %v487
    %489 = vmatprep.subr.mxu0 0.0
    %v490 = vand.u32 %v26, 4294901760
    %v491 = vsub.f32 %v26, %v490
    %v492 = vand.u32 %v491, 4294901760
    %493 = vmatpush1.msra.mxu0 %v492
    %494 = vmatprep.subr.mxu0 0.0
    %v495 = vand.u32 %v27, 4294901760
    %v496 = vsub.f32 %v27, %v495
    %v497 = vand.u32 %v496, 4294901760
    %498 = vmatpush1.msra.mxu0 %v497
    %499 = vmatprep.subr.mxu0 0.0
    %v500 = vand.u32 %v28, 4294901760
    %v501 = vsub.f32 %v28, %v500
    %v502 = vand.u32 %v501, 4294901760
    %503 = vmatpush1.msra.mxu0 %v502
    %504 = vmatprep.subr.mxu0 0.0
    %v505 = vand.u32 %v29, 4294901760
    %v506 = vsub.f32 %v29, %v505
    %v507 = vand.u32 %v506, 4294901760
    %508 = vmatpush1.msra.mxu0 %v507
    %509 = vmatprep.subr.mxu0 0.0
    %v510 = vand.u32 %v30, 4294901760
    %v511 = vsub.f32 %v30, %v510
    %v512 = vand.u32 %v511, 4294901760
    %513 = vmatpush1.msra.mxu0 %v512
    %514 = vmatprep.subr.mxu0 0.0
    %v515 = vand.u32 %v31, 4294901760
    %v516 = vsub.f32 %v31, %v515
    %v517 = vand.u32 %v516, 4294901760
    %518 = vmatpush1.msra.mxu0 %v517
    %519 = vmatprep.subr.mxu0 0.0
    %v520 = vand.u32 %v32, 4294901760
    %v521 = vsub.f32 %v32, %v520
    %v522 = vand.u32 %v521, 4294901760
    %523 = vmatpush1.msra.mxu0 %v522
    %524 = vmatprep.subr.mxu0 0.0
    %v525 = vand.u32 %v33, 4294901760
    %v526 = vsub.f32 %v33, %v525
    %v527 = vand.u32 %v526, 4294901760
    %528 = vmatpush1.msra.mxu0 %v527
    %529 = vmatprep.subr.mxu0 0.0
    %v530 = vand.u32 %v34, 4294901760
    %v531 = vsub.f32 %v34, %v530
    %v532 = vand.u32 %v531, 4294901760
    %533 = vmatpush1.msra.mxu0 %v532
    %534 = vmatprep.subr.mxu0 0.0
    %v535 = vand.u32 %v35, 4294901760
    %v536 = vsub.f32 %v35, %v535
    %v537 = vand.u32 %v536, 4294901760
    %538 = vmatpush1.msra.mxu0 %v537
    %539 = vmatprep.subr.mxu0 0.0
    %v540 = vand.u32 %v36, 4294901760
    %v541 = vsub.f32 %v36, %v540
    %v542 = vand.u32 %v541, 4294901760
    %543 = vmatpush1.msra.mxu0 %v542
    %544 = vmatprep.subr.mxu0 0.0
    %v545 = vand.u32 %v37, 4294901760
    %v546 = vsub.f32 %v37, %v545
    %v547 = vand.u32 %v546, 4294901760
    %548 = vmatpush1.msra.mxu0 %v547
    %549 = vmatprep.subr.mxu0 0.0
    %v550 = vand.u32 %v38, 4294901760
    %v551 = vsub.f32 %v38, %v550
    %v552 = vand.u32 %v551, 4294901760
    %553 = vmatpush1.msra.mxu0 %v552
    %554 = vmatprep.subr.mxu0 0.0
    %555 = vmatpush1.msra.mxu0 0.0
    %556 = vmatprep.subr.mxu0 0.0
    %557 = vmatpush1.msra.mxu0 0.0
    %558 = vmatprep.subr.mxu0 0.0
    %559 = vmatpush1.msra.mxu0 0.0
    %560 = vmatprep.subr.mxu0 0.0
    %561 = vmatpush1.msra.mxu0 0.0
    %562 = vmatprep.subr.mxu0 0.0
    %563 = vmatpush1.msra.mxu0 0.0
    %564 = vmatprep.subr.mxu0 0.0
    %565 = vmatpush1.msra.mxu0 0.0
    %566 = vmatprep.subr.mxu0 0.0
    %567 = vmatpush1.msra.mxu0 0.0
    %568 = vmatprep.subr.mxu0 0.0
    %569 = vmatpush1.msra.mxu0 0.0
    %570 = vmatprep.subr.mxu0 0.0
    %571 = vmatpush1.msra.mxu0 0.0
    %572 = vmatprep.subr.mxu0 0.0
    %573 = vmatpush1.msra.mxu0 0.0
    %574 = vmatprep.subr.mxu0 0.0
    %575 = vmatpush1.msra.mxu0 0.0
    %576 = vmatprep.subr.mxu0 0.0
    %577 = vmatpush1.msra.mxu0 0.0
    %578 = vmatprep.subr.mxu0 0.0
    %579 = vmatpush1.msra.mxu0 0.0
    %580 = vmatprep.subr.mxu0 0.0
    %581 = vmatpush1.msra.mxu0 0.0
    %582 = vmatprep.subr.mxu0 0.0
    %583 = vmatpush1.msra.mxu0 0.0
    %584 = vmatprep.subr.mxu0 0.0
    %585 = vmatpush1.msra.mxu0 0.0
    %586 = vmatprep.mubr.f32.mxu0 0.0
    %v587 = vand.u32 %v22, 4294901760
    %588 = vmatmul.mubr.f32.gmra.mrb[0].mxu0 %v587
    %v589 = vpop.f32.mrb[0].mxu0
    %v590 = vadd.f32 %v471, %v589
    %v591 = vpop.f32.mrb[0].mxu0
    %592 = vdwg.mxu0
    %593 = vmatprep.subr.mxu0 0.0
    %v594 = vand.u32 %v23, 4294901760
    %595 = vmatpush1.msra.mxu0 %v594
    %596 = vmatprep.subr.mxu0 0.0
    %v597 = vand.u32 %v24, 4294901760
    %598 = vmatpush1.msra.mxu0 %v597
    %599 = vmatprep.subr.mxu0 0.0
    %v600 = vand.u32 %v25, 4294901760
    %601 = vmatpush1.msra.mxu0 %v600
    %602 = vmatprep.subr.mxu0 0.0
    %v603 = vand.u32 %v26, 4294901760
    %604 = vmatpush1.msra.mxu0 %v603
    %605 = vmatprep.subr.mxu0 0.0
    %v606 = vand.u32 %v27, 4294901760
    %607 = vmatpush1.msra.mxu0 %v606
    %608 = vmatprep.subr.mxu0 0.0
    %v609 = vand.u32 %v28, 4294901760
    %610 = vmatpush1.msra.mxu0 %v609
    %611 = vmatprep.subr.mxu0 0.0
    %v612 = vand.u32 %v29, 4294901760
    %613 = vmatpush1.msra.mxu0 %v612
    %614 = vmatprep.subr.mxu0 0.0
    %v615 = vand.u32 %v30, 4294901760
    %616 = vmatpush1.msra.mxu0 %v615
    %617 = vmatprep.subr.mxu0 0.0
    %v618 = vand.u32 %v31, 4294901760
    %619 = vmatpush1.msra.mxu0 %v618
    %620 = vmatprep.subr.mxu0 0.0
    %v621 = vand.u32 %v32, 4294901760
    %622 = vmatpush1.msra.mxu0 %v621
    %623 = vmatprep.subr.mxu0 0.0
    %v624 = vand.u32 %v33, 4294901760
    %625 = vmatpush1.msra.mxu0 %v624
    %626 = vmatprep.subr.mxu0 0.0
    %v627 = vand.u32 %v34, 4294901760
    %628 = vmatpush1.msra.mxu0 %v627
    %629 = vmatprep.subr.mxu0 0.0
    %v630 = vand.u32 %v35, 4294901760
    %631 = vmatpush1.msra.mxu0 %v630
    %632 = vmatprep.subr.mxu0 0.0
    %v633 = vand.u32 %v36, 4294901760
    %634 = vmatpush1.msra.mxu0 %v633
    %635 = vmatprep.subr.mxu0 0.0
    %v636 = vand.u32 %v37, 4294901760
    %637 = vmatpush1.msra.mxu0 %v636
    %638 = vmatprep.subr.mxu0 0.0
    %v639 = vand.u32 %v38, 4294901760
    %640 = vmatpush1.msra.mxu0 %v639
    %641 = vmatprep.subr.mxu0 0.0
    %642 = vmatpush1.msra.mxu0 0.0
    %643 = vmatprep.subr.mxu0 0.0
    %644 = vmatpush1.msra.mxu0 0.0
    %645 = vmatprep.subr.mxu0 0.0
    %646 = vmatpush1.msra.mxu0 0.0
    %647 = vmatprep.subr.mxu0 0.0
    %648 = vmatpush1.msra.mxu0 0.0
    %649 = vmatprep.subr.mxu0 0.0
    %650 = vmatpush1.msra.mxu0 0.0
    %651 = vmatprep.subr.mxu0 0.0
    %652 = vmatpush1.msra.mxu0 0.0
    %653 = vmatprep.subr.mxu0 0.0
    %654 = vmatpush1.msra.mxu0 0.0
    %655 = vmatprep.subr.mxu0 0.0
    %656 = vmatpush1.msra.mxu0 0.0
    %657 = vmatprep.subr.mxu0 0.0
    %658 = vmatpush1.msra.mxu0 0.0
    %659 = vmatprep.subr.mxu0 0.0
    %660 = vmatpush1.msra.mxu0 0.0
    %661 = vmatprep.subr.mxu0 0.0
    %662 = vmatpush1.msra.mxu0 0.0
    %663 = vmatprep.subr.mxu0 0.0
    %664 = vmatpush1.msra.mxu0 0.0
    %665 = vmatprep.subr.mxu0 0.0
    %666 = vmatpush1.msra.mxu0 0.0
    %667 = vmatprep.subr.mxu0 0.0
    %668 = vmatpush1.msra.mxu0 0.0
    %669 = vmatprep.subr.mxu0 0.0
    %670 = vmatpush1.msra.mxu0 0.0
    %671 = vmatprep.subr.mxu0 0.0
    %672 = vmatpush1.msra.mxu0 0.0
    %673 = vmatprep.mubr.f32.mxu0 0.0
    %v674 = vand.u32 %v22, 4294901760
    %675 = vmatmul.mubr.f32.gmra.mrb[0].mxu0 %v674
    %v676 = vpop.f32.mrb[0].mxu0
    %v677 = vadd.f32 %v590, %v676
    %v678 = vpop.f32.mrb[0].mxu0
    %679 = vdwg.mxu0
    %v680 = vmul.f32 %v677, 0.03125
    %v681 = vrsqrt.pop %v680
    %v682 = vmul.f32 %v680, %v681
    %vm683 = vcmp.eq.f32.partialorder %v680, inf
    %v684 = vsel %vm683, %v680, %v682
    %vm685 = vcmp.eq.f32.partialorder %v680, 0.0
    %v686 = vand.u32 %v680, 2147483648
    %v687 = vsel %vm685, %v686, %v684
    %v688 = vadd.f32 %v687, 1e-08
    %v689 = vrcp.pop %v688
    %v690 = vmul.f32 1.0, %v689
    %v691 = vld [vmem:[%s4] sm:$0xf]
    %vm692 = vcmask 31744
    %v694 = vsel %vm692, %v690, 0
    %vm696 = vcmask 1043456
    %v698 = vsel %vm696, %v691, 0
    %700 = vmatprep.subr.mxu0 0.0
    %v701 = vand.u32 %v698, 4294901760
    %702 = vmatpush1.msra.mxu0 %v701
    %703 = vmatprep.subr.mxu0 0.0
    %704 = vmatpush1.msra.mxu0 0.0
    %705 = vmatprep.subr.mxu0 0.0
    %706 = vmatpush1.msra.mxu0 0.0
    %707 = vmatprep.subr.mxu0 0.0
    %708 = vmatpush1.msra.mxu0 0.0
    %709 = vmatprep.subr.mxu0 0.0
    %710 = vmatpush1.msra.mxu0 0.0
    %711 = vmatprep.subr.mxu0 0.0
    %712 = vmatpush1.msra.mxu0 0.0
    %713 = vmatprep.subr.mxu0 0.0
    %714 = vmatpush1.msra.mxu0 0.0
    %715 = vmatprep.subr.mxu0 0.0
    %716 = vmatpush1.msra.mxu0 0.0
    %717 = vmatprep.subr.mxu0 0.0
    %718 = vmatpush1.msra.mxu0 0.0
    %719 = vmatprep.subr.mxu0 0.0
    %720 = vmatpush1.msra.mxu0 0.0
    %721 = vmatprep.subr.mxu0 0.0
    %722 = vmatpush1.msra.mxu0 0.0
    %723 = vmatprep.subr.mxu0 0.0
    %724 = vmatpush1.msra.mxu0 0.0
    %725 = vmatprep.subr.mxu0 0.0
    %726 = vmatpush1.msra.mxu0 0.0
    %727 = vmatprep.subr.mxu0 0.0
    %728 = vmatpush1.msra.mxu0 0.0
    %729 = vmatprep.subr.mxu0 0.0
    %730 = vmatpush1.msra.mxu0 0.0
    %731 = vmatprep.subr.mxu0 0.0
    %732 = vmatpush1.msra.mxu0 0.0
    %733 = vmatprep.subr.mxu0 0.0
    %734 = vmatpush1.msra.mxu0 0.0
    %735 = vmatprep.subr.mxu0 0.0
    %736 = vmatpush1.msra.mxu0 0.0
    %737 = vmatprep.subr.mxu0 0.0
    %738 = vmatpush1.msra.mxu0 0.0
    %739 = vmatprep.subr.mxu0 0.0
    %740 = vmatpush1.msra.mxu0 0.0
    %741 = vmatprep.subr.mxu0 0.0
    %742 = vmatpush1.msra.mxu0 0.0
    %743 = vmatprep.subr.mxu0 0.0
    %744 = vmatpush1.msra.mxu0 0.0
    %745 = vmatprep.subr.mxu0 0.0
    %746 = vmatpush1.msra.mxu0 0.0
    %747 = vmatprep.subr.mxu0 0.0
    %748 = vmatpush1.msra.mxu0 0.0
    %749 = vmatprep.subr.mxu0 0.0
    %750 = vmatpush1.msra.mxu0 0.0
    %751 = vmatprep.subr.mxu0 0.0
    %752 = vmatpush1.msra.mxu0 0.0
    %753 = vmatprep.subr.mxu0 0.0
    %754 = vmatpush1.msra.mxu0 0.0
    %755 = vmatprep.subr.mxu0 0.0
    %756 = vmatpush1.msra.mxu0 0.0
    %757 = vmatprep.subr.mxu0 0.0
    %758 = vmatpush1.msra.mxu0 0.0
    %759 = vmatprep.subr.mxu0 0.0
    %760 = vmatpush1.msra.mxu0 0.0
    %761 = vmatprep.subr.mxu0 0.0
    %762 = vmatpush1.msra.mxu0 0.0
    %763 = vmatprep.subr.mxu0 0.0
    %764 = vmatpush1.msra.mxu0 0.0
    %765 = vmatprep.mubr.f32.mxu0 0.0
    %v766 = vand.u32 %v694, 4294901760
    %v767 = vsub.f32 %v694, %v766
    %v768 = vand.u32 %v767, 4294901760
    %v769 = vsub.f32 %v767, %v768
    %v770 = vand.u32 %v769, 4294901760
    %771 = vmatmul.mubr.f32.gmra.mrb[0].mxu0 %v770
    %v772 = vpop.f32.mrb[0].mxu0
    %v773 = vadd.f32 0.0, %v772
    %v774 = vpop.f32.mrb[0].mxu0
    %775 = vdwg.mxu0
    %776 = vmatprep.subr.mxu0 0.0
    %v777 = vand.u32 %v698, 4294901760
    %v778 = vsub.f32 %v698, %v777
    %v779 = vand.u32 %v778, 4294901760
    %v780 = vsub.f32 %v778, %v779
    %v781 = vand.u32 %v780, 4294901760
    %782 = vmatpush1.msra.mxu0 %v781
    %783 = vmatprep.subr.mxu0 0.0
    %784 = vmatpush1.msra.mxu0 0.0
    %785 = vmatprep.subr.mxu0 0.0
    %786 = vmatpush1.msra.mxu0 0.0
    %787 = vmatprep.subr.mxu0 0.0
    %788 = vmatpush1.msra.mxu0 0.0
    %789 = vmatprep.subr.mxu0 0.0
    %790 = vmatpush1.msra.mxu0 0.0
    %791 = vmatprep.subr.mxu0 0.0
    %792 = vmatpush1.msra.mxu0 0.0
    %793 = vmatprep.subr.mxu0 0.0
    %794 = vmatpush1.msra.mxu0 0.0
    %795 = vmatprep.subr.mxu0 0.0
    %796 = vmatpush1.msra.mxu0 0.0
    %797 = vmatprep.subr.mxu0 0.0
    %798 = vmatpush1.msra.mxu0 0.0
    %799 = vmatprep.subr.mxu0 0.0
    %800 = vmatpush1.msra.mxu0 0.0
    %801 = vmatprep.subr.mxu0 0.0
    %802 = vmatpush1.msra.mxu0 0.0
    %803 = vmatprep.subr.mxu0 0.0
    %804 = vmatpush1.msra.mxu0 0.0
    %805 = vmatprep.subr.mxu0 0.0
    %806 = vmatpush1.msra.mxu0 0.0
    %807 = vmatprep.subr.mxu0 0.0
    %808 = vmatpush1.msra.mxu0 0.0
    %809 = vmatprep.subr.mxu0 0.0
    %810 = vmatpush1.msra.mxu0 0.0
    %811 = vmatprep.subr.mxu0 0.0
    %812 = vmatpush1.msra.mxu0 0.0
    %813 = vmatprep.subr.mxu0 0.0
    %814 = vmatpush1.msra.mxu0 0.0
    %815 = vmatprep.subr.mxu0 0.0
    %816 = vmatpush1.msra.mxu0 0.0
    %817 = vmatprep.subr.mxu0 0.0
    %818 = vmatpush1.msra.mxu0 0.0
    %819 = vmatprep.subr.mxu0 0.0
    %820 = vmatpush1.msra.mxu0 0.0
    %821 = vmatprep.subr.mxu0 0.0
    %822 = vmatpush1.msra.mxu0 0.0
    %823 = vmatprep.subr.mxu0 0.0
    %824 = vmatpush1.msra.mxu0 0.0
    %825 = vmatprep.subr.mxu0 0.0
    %826 = vmatpush1.msra.mxu0 0.0
    %827 = vmatprep.subr.mxu0 0.0
    %828 = vmatpush1.msra.mxu0 0.0
    %829 = vmatprep.subr.mxu0 0.0
    %830 = vmatpush1.msra.mxu0 0.0
    %831 = vmatprep.subr.mxu0 0.0
    %832 = vmatpush1.msra.mxu0 0.0
    %833 = vmatprep.subr.mxu0 0.0
    %834 = vmatpush1.msra.mxu0 0.0
    %835 = vmatprep.subr.mxu0 0.0
    %836 = vmatpush1.msra.mxu0 0.0
    %837 = vmatprep.subr.mxu0 0.0
    %838 = vmatpush1.msra.mxu0 0.0
    %839 = vmatprep.subr.mxu0 0.0
    %840 = vmatpush1.msra.mxu0 0.0
    %841 = vmatprep.subr.mxu0 0.0
    %842 = vmatpush1.msra.mxu0 0.0
    %843 = vmatprep.subr.mxu0 0.0
    %844 = vmatpush1.msra.mxu0 0.0
    %845 = vmatprep.mubr.f32.mxu0 0.0
    %v846 = vand.u32 %v694, 4294901760
    %847 = vmatmul.mubr.f32.gmra.mrb[0].mxu0 %v846
    %v848 = vpop.f32.mrb[0].mxu0
    %v849 = vadd.f32 %v773, %v848
    %v850 = vpop.f32.mrb[0].mxu0
    %851 = vdwg.mxu0
    %852 = vmatprep.subr.mxu0 0.0
    %v853 = vand.u32 %v698, 4294901760
    %v854 = vsub.f32 %v698, %v853
    %855 = vmatpush1.msra.mxu0 %v854
    %856 = vmatprep.subr.mxu0 0.0
    %857 = vmatpush1.msra.mxu0 0.0
    %858 = vmatprep.subr.mxu0 0.0
    %859 = vmatpush1.msra.mxu0 0.0
    %860 = vmatprep.subr.mxu0 0.0
    %861 = vmatpush1.msra.mxu0 0.0
    %862 = vmatprep.subr.mxu0 0.0
    %863 = vmatpush1.msra.mxu0 0.0
    %864 = vmatprep.subr.mxu0 0.0
    %865 = vmatpush1.msra.mxu0 0.0
    %866 = vmatprep.subr.mxu0 0.0
    %867 = vmatpush1.msra.mxu0 0.0
    %868 = vmatprep.subr.mxu0 0.0
    %869 = vmatpush1.msra.mxu0 0.0
    %870 = vmatprep.subr.mxu0 0.0
    %871 = vmatpush1.msra.mxu0 0.0
    %872 = vmatprep.subr.mxu0 0.0
    %873 = vmatpush1.msra.mxu0 0.0
    %874 = vmatprep.subr.mxu0 0.0
    %875 = vmatpush1.msra.mxu0 0.0
    %876 = vmatprep.subr.mxu0 0.0
    %877 = vmatpush1.msra.mxu0 0.0
    %878 = vmatprep.subr.mxu0 0.0
    %879 = vmatpush1.msra.mxu0 0.0
    %880 = vmatprep.subr.mxu0 0.0
    %881 = vmatpush1.msra.mxu0 0.0
    %882 = vmatprep.subr.mxu0 0.0
    %883 = vmatpush1.msra.mxu0 0.0
    %884 = vmatprep.subr.mxu0 0.0
    %885 = vmatpush1.msra.mxu0 0.0
    %886 = vmatprep.subr.mxu0 0.0
    %887 = vmatpush1.msra.mxu0 0.0
    %888 = vmatprep.subr.mxu0 0.0
    %889 = vmatpush1.msra.mxu0 0.0
    %890 = vmatprep.subr.mxu0 0.0
    %891 = vmatpush1.msra.mxu0 0.0
    %892 = vmatprep.subr.mxu0 0.0
    %893 = vmatpush1.msra.mxu0 0.0
    %894 = vmatprep.subr.mxu0 0.0
    %895 = vmatpush1.msra.mxu0 0.0
    %896 = vmatprep.subr.mxu0 0.0
    %897 = vmatpush1.msra.mxu0 0.0
    %898 = vmatprep.subr.mxu0 0.0
    %899 = vmatpush1.msra.mxu0 0.0
    %900 = vmatprep.subr.mxu0 0.0
    %901 = vmatpush1.msra.mxu0 0.0
    %902 = vmatprep.subr.mxu0 0.0
    %903 = vmatpush1.msra.mxu0 0.0
    %904 = vmatprep.subr.mxu0 0.0
    %905 = vmatpush1.msra.mxu0 0.0
    %906 = vmatprep.subr.mxu0 0.0
    %907 = vmatpush1.msra.mxu0 0.0
    %908 = vmatprep.subr.mxu0 0.0
    %909 = vmatpush1.msra.mxu0 0.0
    %910 = vmatprep.subr.mxu0 0.0
    %911 = vmatpush1.msra.mxu0 0.0
    %912 = vmatprep.subr.mxu0 0.0
    %913 = vmatpush1.msra.mxu0 0.0
    %914 = vmatprep.subr.mxu0 0.0
    %915 = vmatpush1.msra.mxu0 0.0
    %916 = vmatprep.subr.mxu0 0.0
    %917 = vmatpush1.msra.mxu0 0.0
    %918 = vmatprep.mubr.f32.mxu0 0.0
    %v919 = vand.u32 %v694, 4294901760
    %v920 = vsub.f32 %v694, %v919
    %921 = vmatmul.mubr.f32.gmra.mrb[0].mxu0 %v920
    %v922 = vpop.f32.mrb[0].mxu0
    %v923 = vadd.f32 %v849, %v922
    %v924 = vpop.f32.mrb[0].mxu0
    %925 = vdwg.mxu0
    %926 = vmatprep.subr.mxu0 0.0
    %v927 = vand.u32 %v698, 4294901760
    %928 = vmatpush1.msra.mxu0 %v927
    %929 = vmatprep.subr.mxu0 0.0
    %930 = vmatpush1.msra.mxu0 0.0
    %931 = vmatprep.subr.mxu0 0.0
    %932 = vmatpush1.msra.mxu0 0.0
    %933 = vmatprep.subr.mxu0 0.0
    %934 = vmatpush1.msra.mxu0 0.0
    %935 = vmatprep.subr.mxu0 0.0
    %936 = vmatpush1.msra.mxu0 0.0
    %937 = vmatprep.subr.mxu0 0.0
    %938 = vmatpush1.msra.mxu0 0.0
    %939 = vmatprep.subr.mxu0 0.0
    %940 = vmatpush1.msra.mxu0 0.0
    %941 = vmatprep.subr.mxu0 0.0
    %942 = vmatpush1.msra.mxu0 0.0
    %943 = vmatprep.subr.mxu0 0.0
    %944 = vmatpush1.msra.mxu0 0.0
    %945 = vmatprep.subr.mxu0 0.0
    %946 = vmatpush1.msra.mxu0 0.0
    %947 = vmatprep.subr.mxu0 0.0
    %948 = vmatpush1.msra.mxu0 0.0
    %949 = vmatprep.subr.mxu0 0.0
    %950 = vmatpush1.msra.mxu0 0.0
    %951 = vmatprep.subr.mxu0 0.0
    %952 = vmatpush1.msra.mxu0 0.0
    %953 = vmatprep.subr.mxu0 0.0
    %954 = vmatpush1.msra.mxu0 0.0
    %955 = vmatprep.subr.mxu0 0.0
    %956 = vmatpush1.msra.mxu0 0.0
    %957 = vmatprep.subr.mxu0 0.0
    %958 = vmatpush1.msra.mxu0 0.0
    %959 = vmatprep.subr.mxu0 0.0
    %960 = vmatpush1.msra.mxu0 0.0
    %961 = vmatprep.subr.mxu0 0.0
    %962 = vmatpush1.msra.mxu0 0.0
    %963 = vmatprep.subr.mxu0 0.0
    %964 = vmatpush1.msra.mxu0 0.0
    %965 = vmatprep.subr.mxu0 0.0
    %966 = vmatpush1.msra.mxu0 0.0
    %967 = vmatprep.subr.mxu0 0.0
    %968 = vmatpush1.msra.mxu0 0.0
    %969 = vmatprep.subr.mxu0 0.0
    %970 = vmatpush1.msra.mxu0 0.0
    %971 = vmatprep.subr.mxu0 0.0
    %972 = vmatpush1.msra.mxu0 0.0
    %973 = vmatprep.subr.mxu0 0.0
    %974 = vmatpush1.msra.mxu0 0.0
    %975 = vmatprep.subr.mxu0 0.0
    %976 = vmatpush1.msra.mxu0 0.0
    %977 = vmatprep.subr.mxu0 0.0
    %978 = vmatpush1.msra.mxu0 0.0
    %979 = vmatprep.subr.mxu0 0.0
    %980 = vmatpush1.msra.mxu0 0.0
    %981 = vmatprep.subr.mxu0 0.0
    %982 = vmatpush1.msra.mxu0 0.0
    %983 = vmatprep.subr.mxu0 0.0
    %984 = vmatpush1.msra.mxu0 0.0
    %985 = vmatprep.subr.mxu0 0.0
    %986 = vmatpush1.msra.mxu0 0.0
    %987 = vmatprep.subr.mxu0 0.0
    %988 = vmatpush1.msra.mxu0 0.0
    %989 = vmatprep.subr.mxu0 0.0
    %990 = vmatpush1.msra.mxu0 0.0
    %991 = vmatprep.mubr.f32.mxu0 0.0
    %v992 = vand.u32 %v694, 4294901760
    %v993 = vsub.f32 %v694, %v992
    %v994 = vand.u32 %v993, 4294901760
    %995 = vmatmul.mubr.f32.gmra.mrb[0].mxu0 %v994
    %v996 = vpop.f32.mrb[0].mxu0
    %v997 = vadd.f32 %v923, %v996
    %v998 = vpop.f32.mrb[0].mxu0
    %999 = vdwg.mxu0
    %1000 = vmatprep.subr.mxu0 0.0
    %v1001 = vand.u32 %v698, 4294901760
    %v1002 = vsub.f32 %v698, %v1001
    %v1003 = vand.u32 %v1002, 4294901760
    %1004 = vmatpush1.msra.mxu0 %v1003
    %1005 = vmatprep.subr.mxu0 0.0
    %1006 = vmatpush1.msra.mxu0 0.0
    %1007 = vmatprep.subr.mxu0 0.0
    %1008 = vmatpush1.msra.mxu0 0.0
    %1009 = vmatprep.subr.mxu0 0.0
    %1010 = vmatpush1.msra.mxu0 0.0
    %1011 = vmatprep.subr.mxu0 0.0
    %1012 = vmatpush1.msra.mxu0 0.0
    %1013 = vmatprep.subr.mxu0 0.0
    %1014 = vmatpush1.msra.mxu0 0.0
    %1015 = vmatprep.subr.mxu0 0.0
    %1016 = vmatpush1.msra.mxu0 0.0
    %1017 = vmatprep.subr.mxu0 0.0
    %1018 = vmatpush1.msra.mxu0 0.0
    %1019 = vmatprep.subr.mxu0 0.0
    %1020 = vmatpush1.msra.mxu0 0.0
    %1021 = vmatprep.subr.mxu0 0.0
    %1022 = vmatpush1.msra.mxu0 0.0
    %1023 = vmatprep.subr.mxu0 0.0
    %1024 = vmatpush1.msra.mxu0 0.0
    %1025 = vmatprep.subr.mxu0 0.0
    %1026 = vmatpush1.msra.mxu0 0.0
    %1027 = vmatprep.subr.mxu0 0.0
    %1028 = vmatpush1.msra.mxu0 0.0
    %1029 = vmatprep.subr.mxu0 0.0
    %1030 = vmatpush1.msra.mxu0 0.0
    %1031 = vmatprep.subr.mxu0 0.0
    %1032 = vmatpush1.msra.mxu0 0.0
    %1033 = vmatprep.subr.mxu0 0.0
    %1034 = vmatpush1.msra.mxu0 0.0
    %1035 = vmatprep.subr.mxu0 0.0
    %1036 = vmatpush1.msra.mxu0 0.0
    %1037 = vmatprep.subr.mxu0 0.0
    %1038 = vmatpush1.msra.mxu0 0.0
    %1039 = vmatprep.subr.mxu0 0.0
    %1040 = vmatpush1.msra.mxu0 0.0
    %1041 = vmatprep.subr.mxu0 0.0
    %1042 = vmatpush1.msra.mxu0 0.0
    %1043 = vmatprep.subr.mxu0 0.0
    %1044 = vmatpush1.msra.mxu0 0.0
    %1045 = vmatprep.subr.mxu0 0.0
    %1046 = vmatpush1.msra.mxu0 0.0
    %1047 = vmatprep.subr.mxu0 0.0
    %1048 = vmatpush1.msra.mxu0 0.0
    %1049 = vmatprep.subr.mxu0 0.0
    %1050 = vmatpush1.msra.mxu0 0.0
    %1051 = vmatprep.subr.mxu0 0.0
    %1052 = vmatpush1.msra.mxu0 0.0
    %1053 = vmatprep.subr.mxu0 0.0
    %1054 = vmatpush1.msra.mxu0 0.0
    %1055 = vmatprep.subr.mxu0 0.0
    %1056 = vmatpush1.msra.mxu0 0.0
    %1057 = vmatprep.subr.mxu0 0.0
    %1058 = vmatpush1.msra.mxu0 0.0
    %1059 = vmatprep.subr.mxu0 0.0
    %1060 = vmatpush1.msra.mxu0 0.0
    %1061 = vmatprep.subr.mxu0 0.0
    %1062 = vmatpush1.msra.mxu0 0.0
    %1063 = vmatprep.subr.mxu0 0.0
    %1064 = vmatpush1.msra.mxu0 0.0
    %1065 = vmatprep.subr.mxu0 0.0
    %1066 = vmatpush1.msra.mxu0 0.0
    %1067 = vmatprep.mubr.f32.mxu0 0.0
    %v1068 = vand.u32 %v694, 4294901760
    %1069 = vmatmul.mubr.f32.gmra.mrb[0].mxu0 %v1068
    %v1070 = vpop.f32.mrb[0].mxu0
    %v1071 = vadd.f32 %v997, %v1070
    %v1072 = vpop.f32.mrb[0].mxu0
    %1073 = vdwg.mxu0
    %1074 = vmatprep.subr.mxu0 0.0
    %v1075 = vand.u32 %v698, 4294901760
    %1076 = vmatpush1.msra.mxu0 %v1075
    %1077 = vmatprep.subr.mxu0 0.0
    %1078 = vmatpush1.msra.mxu0 0.0
    %1079 = vmatprep.subr.mxu0 0.0
    %1080 = vmatpush1.msra.mxu0 0.0
    %1081 = vmatprep.subr.mxu0 0.0
    %1082 = vmatpush1.msra.mxu0 0.0
    %1083 = vmatprep.subr.mxu0 0.0
    %1084 = vmatpush1.msra.mxu0 0.0
    %1085 = vmatprep.subr.mxu0 0.0
    %1086 = vmatpush1.msra.mxu0 0.0
    %1087 = vmatprep.subr.mxu0 0.0
    %1088 = vmatpush1.msra.mxu0 0.0
    %1089 = vmatprep.subr.mxu0 0.0
    %1090 = vmatpush1.msra.mxu0 0.0
    %1091 = vmatprep.subr.mxu0 0.0
    %1092 = vmatpush1.msra.mxu0 0.0
    %1093 = vmatprep.subr.mxu0 0.0
    %1094 = vmatpush1.msra.mxu0 0.0
    %1095 = vmatprep.subr.mxu0 0.0
    %1096 = vmatpush1.msra.mxu0 0.0
    %1097 = vmatprep.subr.mxu0 0.0
    %1098 = vmatpush1.msra.mxu0 0.0
    %1099 = vmatprep.subr.mxu0 0.0
    %1100 = vmatpush1.msra.mxu0 0.0
    %1101 = vmatprep.subr.mxu0 0.0
    %1102 = vmatpush1.msra.mxu0 0.0
    %1103 = vmatprep.subr.mxu0 0.0
    %1104 = vmatpush1.msra.mxu0 0.0
    %1105 = vmatprep.subr.mxu0 0.0
    %1106 = vmatpush1.msra.mxu0 0.0
    %1107 = vmatprep.subr.mxu0 0.0
    %1108 = vmatpush1.msra.mxu0 0.0
    %1109 = vmatprep.subr.mxu0 0.0
    %1110 = vmatpush1.msra.mxu0 0.0
    %1111 = vmatprep.subr.mxu0 0.0
    %1112 = vmatpush1.msra.mxu0 0.0
    %1113 = vmatprep.subr.mxu0 0.0
    %1114 = vmatpush1.msra.mxu0 0.0
    %1115 = vmatprep.subr.mxu0 0.0
    %1116 = vmatpush1.msra.mxu0 0.0
    %1117 = vmatprep.subr.mxu0 0.0
    %1118 = vmatpush1.msra.mxu0 0.0
    %1119 = vmatprep.subr.mxu0 0.0
    %1120 = vmatpush1.msra.mxu0 0.0
    %1121 = vmatprep.subr.mxu0 0.0
    %1122 = vmatpush1.msra.mxu0 0.0
    %1123 = vmatprep.subr.mxu0 0.0
    %1124 = vmatpush1.msra.mxu0 0.0
    %1125 = vmatprep.subr.mxu0 0.0
    %1126 = vmatpush1.msra.mxu0 0.0
    %1127 = vmatprep.subr.mxu0 0.0
    %1128 = vmatpush1.msra.mxu0 0.0
    %1129 = vmatprep.subr.mxu0 0.0
    %1130 = vmatpush1.msra.mxu0 0.0
    %1131 = vmatprep.subr.mxu0 0.0
    %1132 = vmatpush1.msra.mxu0 0.0
    %1133 = vmatprep.subr.mxu0 0.0
    %1134 = vmatpush1.msra.mxu0 0.0
    %1135 = vmatprep.subr.mxu0 0.0
    %1136 = vmatpush1.msra.mxu0 0.0
    %1137 = vmatprep.subr.mxu0 0.0
    %1138 = vmatpush1.msra.mxu0 0.0
    %1139 = vmatprep.mubr.f32.mxu0 0.0
    %v1140 = vand.u32 %v694, 4294901760
    %1141 = vmatmul.mubr.f32.gmra.mrb[0].mxu0 %v1140
    %v1142 = vpop.f32.mrb[0].mxu0
    %v1143 = vadd.f32 %v1071, %v1142
    %v1144 = vpop.f32.mrb[0].mxu0
    %1145 = vdwg.mxu0
    %v1146 = vmul.f32 %v21, %v1143
    %v1147 = vld [vmem:[%s1] sm:$0x1]
    %v1149 = vlaneseq
    %v1150 = vshrl.u32 %v1149, 7
    %v1151 = vsub.s32 0, %v1150
    %v1152 = vrot.slane %v1147, %v1151
    %v1154 = vmul.f32 %v1146, %v1152
    %v1155 = vld [vmem:[%s2] sm:$0x1]
    %v1157 = vlaneseq
    %v1158 = vshrl.u32 %v1157, 7
    %v1159 = vsub.s32 0, %v1158
    %v1160 = vrot.slane %v1155, %v1159
    %v1162 = vadd.f32 %v1154, %v1160
    %1163 = vst [vmem:[#allocation2] sm:$0xf] %v1162
    // Predicated region
    $region22: #{tpu_custom_call.1} parent=1 // pred_check
      _
    $region23: #{tpu_custom_call.1} parent=1 // pred_check_branch
      %1165 = sbr.rel (0) target = $region25
    $region24: #{tpu_custom_call.1} parent=1 // pred_region
      %s1167 = ssub.s32 64, 64
      %1168 = vsyncadd [#allocation3], %s1167
      %s1170 = sshll.u32 [#allocation2], 4
      %s1171 = int_to_ptr.vmem [resolvable:$true] %s1170
      %1173 = dma.vmem_to_hbm [thread:$0]  %s1171, 64, %s5, [#allocation3]
    $region25: #{tpu_custom_call.1} parent=1 // pred_fallthru
      _
    // Predicated region
    $region26: #{tpu_custom_call.1} parent=1 // pred_check
      _
    $region27: #{tpu_custom_call.1} parent=1 // pred_check_branch
      %1175 = sbr.rel (0) target = $region29
    $region28: #{tpu_custom_call.1} parent=1 // pred_region
      %1176 = dma.done [#allocation3], 64
    $region29: #{tpu_custom_call.1} parent=1 // pred_fallthru
      _
    %1177 = vsyncpa [#allocation3], 1

</llo_original>
